<compile_context>
chip_gen: v5e
topology: v5e:2x2
jax: 0.10.0
libtpu: 0.0.40
codegen_flags: <defaults>
</compile_context>

<pallas_src>
import functools

import jax
import jax.lax as lax
import jax.numpy as jnp
from jax.experimental import pallas as pl
from jax.experimental.pallas import tpu as pltpu


# ----------------------------------------------------------------------------
# helpers
# ----------------------------------------------------------------------------

def _round_up(x, m):
    return (x + m - 1) // m * m


def _pad2d(a, rows, cols):
    return jnp.pad(a, ((0, rows - a.shape[0]), (0, cols - a.shape[1])))


_VMEM_LIMIT = 48 * 1024 * 1024  # leave headroom below v7x's 64 MiB physical


def _pick_tile(n_p, max_tile, min_tiles=1):
    """Largest 128-multiple tile <= max_tile dividing n_p, keeping at least
    `min_tiles` tiles when possible (megacore wants >=2 parallel row tiles)."""
    for cand in (2048, 1024, 512, 256, 128):
        if cand <= max_tile and n_p % cand == 0 and n_p // cand >= min_tiles:
            return cand
    return 128


# ----------------------------------------------------------------------------
# Pallas kernels
# ----------------------------------------------------------------------------

def _graphconv_kernel(a_ref, xk_ref, xi_ref, wr_ref, ws_ref, b_ref, o_ref,
                      acc_ref):
    """One GraphConv layer + ReLU, tiled over (row tiles i, reduction tiles k).

    a_ref  : [tm, tk]  int8  dense adjacency tile, A[dst, src]
    xk_ref : [tk, Fp]  bf16  node features (k-th row tile)  -> aggregation
    xi_ref : [tm, Fp]  bf16  node features (i-th row tile)  -> self/root term
    wr_ref : [Fp, Hp]  bf16  lin_rel weight, pre-transposed
    ws_ref : [Fp, Hp]  bf16  lin_root weight, pre-transposed
    b_ref  : [1, Hp]   f32   lin_rel bias
    o_ref  : [tm, Hp]  bf16  output tile (same block across k => resident)
    acc_ref: [tm, Fp]  f32   scratch accumulator for sum_j x_j
    """
    k = pl.program_id(1)

    @pl.when(k == 0)
    def _():
        acc_ref[...] = jnp.zeros_like(acc_ref)

    # int8 adjacency stored in HBM, upcast to bf16 in-register (VPU is idle
    # on this memory-bound loop) -> half the dominant HBM stream vs bf16.
    a = a_ref[...].astype(jnp.bfloat16)
    acc_ref[...] += jnp.dot(a, xk_ref[...], preferred_element_type=jnp.float32)

    @pl.when(k == pl.num_programs(1) - 1)
    def _():
        # Two dots against separate weight refs (no concat / no VMEM temp).
        h = jnp.dot(acc_ref[...].astype(jnp.bfloat16), wr_ref[...],
                    preferred_element_type=jnp.float32)
        h += jnp.dot(xi_ref[...], ws_ref[...],
                     preferred_element_type=jnp.float32)
        h += b_ref[...]
        o_ref[...] = jnp.maximum(h, 0.0).astype(o_ref.dtype)


def _pool_head_kernel(p_ref, h_ref, w1_ref, b1_ref, w2_ref, b2_ref, o_ref,
                      acc_ref, *, num_classes):
    """global_add_pool fused with fc1 -> relu -> (dropout=id) -> fc2 ->
    log_softmax.  Grid iterates over node tiles (reduction only).

    p_ref  : [Gp, tk]  int8  pooling matrix tile (P[g, n] = 1 iff batch[n]==g)
    h_ref  : [tk, Hp]  bf16  node features tile
    w1_ref : [Hp, Hp]  bf16  fc1 weight, pre-transposed
    b1_ref : [1, Hp]   f32
    w2_ref : [Hp, Cp]  bf16  fc2 weight, pre-transposed
    b2_ref : [1, Cp]   f32
    o_ref  : [Gp, Cp]  f32   log-probabilities (padded classes masked)
    acc_ref: [Gp, Hp]  f32   pooled-feature accumulator
    """
    k = pl.program_id(0)

    @pl.when(k == 0)
    def _():
        acc_ref[...] = jnp.zeros_like(acc_ref)

    p = p_ref[...].astype(jnp.bfloat16)
    acc_ref[...] += jnp.dot(p, h_ref[...], preferred_element_type=jnp.float32)

    @pl.when(k == pl.num_programs(0) - 1)
    def _():
        pooled = acc_ref[...].astype(jnp.bfloat16)
        h1 = jnp.dot(pooled, w1_ref[...], preferred_element_type=jnp.float32)
        h1 = jnp.maximum(h1 + b1_ref[...], 0.0)
        # TODO(synk): dropout(p=0.5) is identity here (inference/eval mode).
        logits = jnp.dot(h1.astype(jnp.bfloat16), w2_ref[...],
                         preferred_element_type=jnp.float32) + b2_ref[...]
        # Mask zero-padded class columns before the softmax.
        col = lax.broadcasted_iota(jnp.int32, logits.shape, 1)
        logits = jnp.where(col < num_classes, logits, -1e30)
        m = jnp.max(logits, axis=-1, keepdims=True)
        lse = m + jnp.log(jnp.sum(jnp.exp(logits - m), axis=-1, keepdims=True))
        o_ref[...] = logits - lse


# ----------------------------------------------------------------------------
# pallas_call wrappers
# ----------------------------------------------------------------------------

def graphconv_relu(adj_i8, x, w_rel_t, w_root_t, bias, *, tm, tk):
    """adj_i8: [Np, Np] int8, x: [Np, Fp] bf16, w_*_t: [Fp, Hp] bf16,
    bias: [1, Hp] f32  ->  [Np, Hp] bf16."""
    n_p = adj_i8.shape[0]
    fp = x.shape[1]
    hp = w_rel_t.shape[1]
    grid = (n_p // tm, n_p // tk)
    return pl.pallas_call(
        _graphconv_kernel,
        out_shape=jax.ShapeDtypeStruct((n_p, hp), jnp.bfloat16),
        grid_spec=pltpu.PrefetchScalarGridSpec(
            num_scalar_prefetch=0,
            grid=grid,
            in_specs=[
                pl.BlockSpec((tm, tk), lambda i, k: (i, k)),   # A (int8)
                pl.BlockSpec((tk, fp), lambda i, k: (k, 0)),   # X (aggregation)
                pl.BlockSpec((tm, fp), lambda i, k: (i, 0)),   # X (self/root)
                pl.BlockSpec((fp, hp), lambda i, k: (0, 0)),   # W_rel^T
                pl.BlockSpec((fp, hp), lambda i, k: (0, 0)),   # W_root^T
                pl.BlockSpec((1, hp), lambda i, k: (0, 0)),    # bias
            ],
            out_specs=pl.BlockSpec((tm, hp), lambda i, k: (i, 0)),
            scratch_shapes=[pltpu.VMEM((tm, fp), jnp.float32)],
        ),
        compiler_params=pltpu.CompilerParams(
            dimension_semantics=("parallel", "arbitrary"),
            vmem_limit_bytes=_VMEM_LIMIT,
        ),
    )(adj_i8, x, x, w_rel_t, w_root_t, bias)


def pool_and_head(pool_i8, h, w1, b1, w2, b2, *, tk, num_classes):
    """pool_i8: [Gp, Np] int8, h: [Np, Hp] bf16  ->  log-probs [Gp, Cp] f32."""
    gp, n_p = pool_i8.shape
    hp = h.shape[1]
    cp = w2.shape[1]
    grid = (n_p // tk,)
    kernel = functools.partial(_pool_head_kernel, num_classes=num_classes)
    return pl.pallas_call(
        kernel,
        out_shape=jax.ShapeDtypeStruct((gp, cp), jnp.float32),
        grid_spec=pltpu.PrefetchScalarGridSpec(
            num_scalar_prefetch=0,
            grid=grid,
            in_specs=[
                pl.BlockSpec((gp, tk), lambda k: (0, k)),   # pooling tile
                pl.BlockSpec((tk, hp), lambda k: (k, 0)),   # node features
                pl.BlockSpec((hp, hp), lambda k: (0, 0)),   # fc1 W^T
                pl.BlockSpec((1, hp), lambda k: (0, 0)),    # fc1 b
                pl.BlockSpec((hp, cp), lambda k: (0, 0)),   # fc2 W^T
                pl.BlockSpec((1, cp), lambda k: (0, 0)),    # fc2 b
            ],
            out_specs=pl.BlockSpec((gp, cp), lambda k: (0, 0)),
            scratch_shapes=[pltpu.VMEM((gp, hp), jnp.float32)],
        ),
        compiler_params=pltpu.CompilerParams(
            dimension_semantics=("arbitrary",),
            vmem_limit_bytes=_VMEM_LIMIT,
        ),
    )(pool_i8, h, w1, b1, w2, b2)


# ----------------------------------------------------------------------------
# Parameter init (PyTorch layout / shapes) + host-side prep for the kernels
# ----------------------------------------------------------------------------

def _linear_params(key, fan_in, fan_out, with_bias=True):
    k_w, k_b = jax.random.split(key)
    bound = 1.0 / jnp.sqrt(jnp.float32(fan_in))
    w = jax.random.uniform(k_w, (fan_out, fan_in), jnp.float32, -bound, bound)
    if with_bias:
        b = jax.random.uniform(k_b, (1, fan_out), jnp.float32, -bound, bound)
        return w, b
    return w


def init_gnn_params(key, num_classes, hidden_dim, node_features_dim):
    keys = jax.random.split(key, 12)
    params = {"convs": []}
    in_dims = [node_features_dim] + [hidden_dim] * 4
    for i, fin in enumerate(in_dims):
        w_rel, b = _linear_params(keys[2 * i], fin, hidden_dim, with_bias=True)
        w_root = _linear_params(keys[2 * i + 1], fin, hidden_dim,
                                with_bias=False)
        params["convs"].append({"w_rel": w_rel, "w_root": w_root, "b": b})
    params["fc1_w"], params["fc1_b"] = _linear_params(keys[10], hidden_dim,
                                                      hidden_dim)
    params["fc2_w"], params["fc2_b"] = _linear_params(keys[11], hidden_dim,
                                                      num_classes)
    return params


def prepare_kernel_params(params, num_classes, hidden_dim, node_features_dim):
    """Pre-transpose to [Fin, Fout], zero-pad to lane-dense dims, cast weights
    to bf16 (biases stay f32)."""
    hp = _round_up(hidden_dim, 128)
    cp = _round_up(num_classes, 128)
    prepped = {"convs": [], "hp": hp, "cp": cp}
    in_dims = [node_features_dim] + [hidden_dim] * 4
    for conv, fin in zip(params["convs"], in_dims):
        fp = _round_up(fin, 128)
        prepped["convs"].append({
            "wr": _pad2d(conv["w_rel"].T, fp, hp).astype(jnp.bfloat16),
            "ws": _pad2d(conv["w_root"].T, fp, hp).astype(jnp.bfloat16),
            "b": _pad2d(conv["b"], 1, hp),
            "fp": fp,
        })
    prepped["fc1_w"] = _pad2d(params["fc1_w"].T, hp, hp).astype(jnp.bfloat16)
    prepped["fc1_b"] = _pad2d(params["fc1_b"], 1, hp)
    prepped["fc2_w"] = _pad2d(params["fc2_w"].T, hp, cp).astype(jnp.bfloat16)
    prepped["fc2_b"] = _pad2d(params["fc2_b"], 1, cp)
    return prepped


# ----------------------------------------------------------------------------
# Forward pass
# ----------------------------------------------------------------------------

def gnn_forward(prepped, x, edge_index, batch, *, num_graphs, num_classes):
    """x: [N, F] float32, edge_index: [2, E] int32 (row0=src, row1=dst),
    batch: [N] int32 node->graph map.  Returns log-probabilities [G, C]."""
    n, _ = x.shape
    f0p = prepped["convs"][0]["fp"]

    # Padding granularity decoupled from tile size (A scales as N^2).
    n_p = _round_up(n, 128)
    g_p = _round_up(num_graphs, 32)

    # Row-tile axis ("parallel"): keep >=2 tiles when possible so the v7x
    # megacore can shard it.  Reduction axis ("arbitrary"): as wide as fits.
    tm = _pick_tile(n_p, 1024, min_tiles=2)
    tk = _pick_tile(n_p, 2048, min_tiles=1)

    # Densify graph structure on the host, directly in int8 (exact for edge
    # multiplicities <= 127; no N^2 f32 intermediate).
    # TODO(synk): for large sparse graphs, skip all-zero A tiles entirely via
    # PrefetchScalarGridSpec scalar-prefetched per-row nonzero-tile lists
    # (compacted reduction axis) — order-of-magnitude win at scale.
    src, dst = edge_index[0], edge_index[1]
    adj = jnp.zeros((n_p, n_p), jnp.int8).at[dst, src].add(
        jnp.ones_like(src, jnp.int8))
    pool = jnp.zeros((g_p, n_p), jnp.int8).at[
        batch, jnp.arange(n)].set(jnp.int8(1))

    h = _pad2d(x.astype(jnp.float32), n_p, f0p).astype(jnp.bfloat16)
    for conv in prepped["convs"]:
        h = graphconv_relu(adj, h, conv["wr"], conv["ws"], conv["b"],
                           tm=tm, tk=tk)

    logp = pool_and_head(pool, h, prepped["fc1_w"], prepped["fc1_b"],
                         prepped["fc2_w"], prepped["fc2_b"],
                         tk=tk, num_classes=num_classes)
    return logp[:num_graphs, :num_classes]


# ----------------------------------------------------------------------------
# Pure-JAX f32 reference (for correctness check only)
# ----------------------------------------------------------------------------

def gnn_reference(params, x, edge_index, batch, num_graphs):
    n = x.shape[0]
    src, dst = edge_index[0], edge_index[1]
    adj = jnp.zeros((n, n), jnp.float32).at[dst, src].add(1.0)
    h = x.astype(jnp.float32)
    for conv in params["convs"]:
        agg = adj @ h
        h = jax.nn.relu(agg @ conv["w_rel"].T + conv["b"] + h @ conv["w_root"].T)
    hidden = params["fc1_w"].shape[1]
    pooled = jnp.zeros((num_graphs, hidden), jnp.float32).at[batch].add(h)
    h1 = jax.nn.relu(pooled @ params["fc1_w"].T + params["fc1_b"])
    logits = h1 @ params["fc2_w"].T + params["fc2_b"]
    return jax.nn.log_softmax(logits, axis=-1)


# ----------------------------------------------------------------------------
# Demo
# ----------------------------------------------------------------------------

if __name__ == "__main__":
    NUM_NODES = 16
    NODE_FEATURES_DIM = 8
    HIDDEN_DIM = 32
    NUM_CLASSES = 4
    NUM_EDGES = 40
    NUM_GRAPHS = 2

    key = jax.random.PRNGKey(0)
    k_params, k_x, k_src, k_dst = jax.random.split(key, 4)

    params = init_gnn_params(k_params, NUM_CLASSES, HIDDEN_DIM,
                             NODE_FEATURES_DIM)
    prepped = prepare_kernel_params(params, NUM_CLASSES, HIDDEN_DIM,
                                    NODE_FEATURES_DIM)

    x = jax.random.normal(k_x, (NUM_NODES, NODE_FEATURES_DIM), jnp.float32)
    src = jax.random.randint(k_src, (NUM_EDGES,), 0, NUM_NODES, jnp.int32)
    dst = jax.random.randint(k_dst, (NUM_EDGES,), 0, NUM_NODES, jnp.int32)
    edge_index = jnp.stack([src, dst], axis=0)                       # [2, E]
    # first half of the nodes -> graph 0, second half -> graph 1
    batch = (jnp.arange(NUM_NODES, dtype=jnp.int32) >= NUM_NODES // 2
             ).astype(jnp.int32)

    logprobas = jax.block_until_ready(
        gnn_forward(prepped, x, edge_index, batch,
                    num_graphs=NUM_GRAPHS, num_classes=NUM_CLASSES))

    ref = gnn_reference(params, x, edge_index, batch, NUM_GRAPHS)

    assert logprobas.shape == (NUM_GRAPHS, NUM_CLASSES)
    assert bool(jnp.all(jnp.isfinite(logprobas)))
    # rows of log_softmax output must (approximately) sum to 1 in prob space
    assert bool(jnp.allclose(jnp.sum(jnp.exp(logprobas), axis=-1), 1.0,
                             atol=1e-3))
    # loose tolerance: kernel uses bf16 operands / f32 accumulation
    assert float(jnp.max(jnp.abs(logprobas - ref))) < 0.5
    print("KERNEL_OK")
</pallas_src>

<mosaic_0001>
module attributes {stable_mosaic.version = 11 : i64} {
  func.func @_graphconv_kernel(%arg0: i32, %arg1: i32, %arg2: memref<128x128xi8, #tpu.memory_space<vmem>>, %arg3: memref<128x128xbf16, #tpu.memory_space<vmem>>, %arg4: memref<128x128xbf16, #tpu.memory_space<vmem>>, %arg5: memref<128x128xbf16, #tpu.memory_space<vmem>>, %arg6: memref<128x128xbf16, #tpu.memory_space<vmem>>, %arg7: memref<1x128xf32, #tpu.memory_space<vmem>>, %arg8: memref<128x128xbf16, #tpu.memory_space<vmem>>, %arg9: memref<128x128xf32, #tpu.memory_space<vmem>>) attributes {dimension_semantics = [#tpu.dimension_semantics<parallel>, #tpu.dimension_semantics<arbitrary>], iteration_bounds = array<i64: 1, 1>, scalar_prefetch = 0 : i64, scratch_operands = 1 : i64, tpu.core_type = #tpu.core_type<tc>, window_params = [{transform_indices = @transform_0, window_bounds = array<i64: 128, 128>}, {transform_indices = @transform_1, window_bounds = array<i64: 128, 128>}, {transform_indices = @transform_2, window_bounds = array<i64: 128, 128>}, {pipeline_mode = #tpu.pipeline_mode<synchronous>, transform_indices = @transform_3, window_bounds = array<i64: 128, 128>}, {pipeline_mode = #tpu.pipeline_mode<synchronous>, transform_indices = @transform_4, window_bounds = array<i64: 128, 128>}, {pipeline_mode = #tpu.pipeline_mode<synchronous>, transform_indices = @transform_5, window_bounds = array<i64: 1, 128>}, {transform_indices = @transform_6, window_bounds = array<i64: 128, 128>}]} {
    %c0_i32 = arith.constant 0 : i32
    %0 = arith.cmpi eq, %arg1, %c0_i32 : i32
    %1 = arith.extui %0 : i1 to i32
    %c0_i32_0 = arith.constant 0 : i32
    %2 = arith.cmpi ne, %1, %c0_i32_0 : i32
    scf.if %2 {
      %cst_10 = arith.constant 0.000000e+00 : f32
      %13 = vector.broadcast %cst_10 : f32 to vector<128x128xf32>
      %c0_11 = arith.constant 0 : index
      %c0_12 = arith.constant 0 : index
      %14 = vector.load %arg9[%c0_11, %c0_12] : memref<128x128xf32, #tpu.memory_space<vmem>>, vector<128x128xf32>
      tpu.vector_store %arg9[%c0_11, %c0_12], %13 {strides = array<i32>} : memref<128x128xf32, #tpu.memory_space<vmem>>, vector<128x128xf32>,
    } else {
    }
    %c0 = arith.constant 0 : index
    %c0_1 = arith.constant 0 : index
    %3 = vector.load %arg2[%c0, %c0_1] : memref<128x128xi8, #tpu.memory_space<vmem>>, vector<128x128xi8>
    %4 = arith.sitofp %3 : vector<128x128xi8> to vector<128x128xbf16>
    %c0_2 = arith.constant 0 : index
    %c0_3 = arith.constant 0 : index
    %5 = vector.load %arg9[%c0_2, %c0_3] : memref<128x128xf32, #tpu.memory_space<vmem>>, vector<128x128xf32>
    %c0_4 = arith.constant 0 : index
    %c0_5 = arith.constant 0 : index
    %6 = vector.load %arg3[%c0_4, %c0_5] : memref<128x128xbf16, #tpu.memory_space<vmem>>, vector<128x128xbf16>
    %cst = arith.constant dense<0.000000e+00> : vector<128x128xf32>
    %7 = tpu.matmul %4, %6, %cst {dimension_numbers = #tpu.dot_dimension_numbers<[1], [0], [0], [1], [0, 0, 1, 1], [], []>} : vector<128x128xbf16>, vector<128x128xbf16>, vector<128x128xf32> -> vector<128x128xf32>
    %8 = arith.addf %5, %7 : vector<128x128xf32>
    %c0_6 = arith.constant 0 : index
    %c0_7 = arith.constant 0 : index
    %9 = vector.load %arg9[%c0_6, %c0_7] : memref<128x128xf32, #tpu.memory_space<vmem>>, vector<128x128xf32>
    tpu.vector_store %arg9[%c0_6, %c0_7], %8 {strides = array<i32>} : memref<128x128xf32, #tpu.memory_space<vmem>>, vector<128x128xf32>,
    %c0_i32_8 = arith.constant 0 : i32
    %10 = arith.cmpi eq, %arg1, %c0_i32_8 : i32
    %11 = arith.extui %10 : i1 to i32
    %c0_i32_9 = arith.constant 0 : i32
    %12 = arith.cmpi ne, %11, %c0_i32_9 : i32
    scf.if %12 {
      %c0_10 = arith.constant 0 : index
      %c0_11 = arith.constant 0 : index
      %13 = vector.load %arg9[%c0_10, %c0_11] : memref<128x128xf32, #tpu.memory_space<vmem>>, vector<128x128xf32>
      %14 = arith.truncf %13 : vector<128x128xf32> to vector<128x128xbf16>
      %c0_12 = arith.constant 0 : index
      %c0_13 = arith.constant 0 : index
      %15 = vector.load %arg5[%c0_12, %c0_13] : memref<128x128xbf16, #tpu.memory_space<vmem>>, vector<128x128xbf16>
      %cst_14 = arith.constant dense<0.000000e+00> : vector<128x128xf32>
      %16 = tpu.matmul %14, %15, %cst_14 {dimension_numbers = #tpu.dot_dimension_numbers<[1], [0], [0], [1], [0, 0, 1, 1], [], []>} : vector<128x128xbf16>, vector<128x128xbf16>, vector<128x128xf32> -> vector<128x128xf32>
      %c0_15 = arith.constant 0 : index
      %c0_16 = arith.constant 0 : index
      %17 = vector.load %arg4[%c0_15, %c0_16] : memref<128x128xbf16, #tpu.memory_space<vmem>>, vector<128x128xbf16>
      %c0_17 = arith.constant 0 : index
      %c0_18 = arith.constant 0 : index
      %18 = vector.load %arg6[%c0_17, %c0_18] : memref<128x128xbf16, #tpu.memory_space<vmem>>, vector<128x128xbf16>
      %cst_19 = arith.constant dense<0.000000e+00> : vector<128x128xf32>
      %19 = tpu.matmul %17, %18, %cst_19 {dimension_numbers = #tpu.dot_dimension_numbers<[1], [0], [0], [1], [0, 0, 1, 1], [], []>} : vector<128x128xbf16>, vector<128x128xbf16>, vector<128x128xf32> -> vector<128x128xf32>
      %20 = arith.addf %16, %19 : vector<128x128xf32>
      %c0_20 = arith.constant 0 : index
      %c0_21 = arith.constant 0 : index
      %21 = vector.load %arg7[%c0_20, %c0_21] : memref<1x128xf32, #tpu.memory_space<vmem>>, vector<1x128xf32>
      %22 = vector.broadcast %21 : vector<1x128xf32> to vector<128x128xf32>
      %23 = arith.addf %20, %22 : vector<128x128xf32>
      %cst_22 = arith.constant 0.000000e+00 : f32
      %24 = vector.broadcast %cst_22 : f32 to vector<128x128xf32>
      %25 = arith.maximumf %23, %24 : vector<128x128xf32>
      %26 = arith.truncf %25 : vector<128x128xf32> to vector<128x128xbf16>
      %c0_23 = arith.constant 0 : index
      %c0_24 = arith.constant 0 : index
      %27 = vector.load %arg8[%c0_23, %c0_24] : memref<128x128xbf16, #tpu.memory_space<vmem>>, vector<128x128xbf16>
      tpu.vector_store %arg8[%c0_23, %c0_24], %26 {strides = array<i32>} : memref<128x128xbf16, #tpu.memory_space<vmem>>, vector<128x128xbf16>,
    } else {
    }
    return
  }
  func.func @transform_0(%arg0: i32, %arg1: i32) -> (i32, i32) {
    %c0_i32 = arith.constant 0 : i32
    return %arg0, %arg1 : i32, i32
  }
  func.func @transform_1(%arg0: i32, %arg1: i32) -> (i32, i32) {
    %c0_i32 = arith.constant 0 : i32
    %c0_i32_0 = arith.constant 0 : i32
    return %arg1, %c0_i32 : i32, i32
  }
  func.func @transform_2(%arg0: i32, %arg1: i32) -> (i32, i32) {
    %c0_i32 = arith.constant 0 : i32
    %c0_i32_0 = arith.constant 0 : i32
    return %arg0, %c0_i32 : i32, i32
  }
  func.func @transform_3(%arg0: i32, %arg1: i32) -> (i32, i32) {
    %c0_i32 = arith.constant 0 : i32
    %c0_i32_0 = arith.constant 0 : i32
    %c0_i32_1 = arith.constant 0 : i32
    return %c0_i32, %c0_i32_0 : i32, i32
  }
  func.func @transform_4(%arg0: i32, %arg1: i32) -> (i32, i32) {
    %c0_i32 = arith.constant 0 : i32
    %c0_i32_0 = arith.constant 0 : i32
    %c0_i32_1 = arith.constant 0 : i32
    return %c0_i32, %c0_i32_0 : i32, i32
  }
  func.func @transform_5(%arg0: i32, %arg1: i32) -> (i32, i32) {
    %c0_i32 = arith.constant 0 : i32
    %c0_i32_0 = arith.constant 0 : i32
    %c0_i32_1 = arith.constant 0 : i32
    return %c0_i32, %c0_i32_0 : i32, i32
  }
  func.func @transform_6(%arg0: i32, %arg1: i32) -> (i32, i32) {
    %c0_i32 = arith.constant 0 : i32
    %c0_i32_0 = arith.constant 0 : i32
    return %arg0, %c0_i32 : i32, i32
  }
}

</mosaic_0001>

<llo_original>
// kernel: tpu_custom_call.1
$region0: #{tpu_custom_call.1}
  #allocation0 [shape = 'u32[]', space=smem, size = 0x4, offset = 0x4, fixed_abs, tag = 'smem constant byte address 0x4 - core index']
  #allocation1 [shape = 'u32[72,128]{1,0:T(1,128)}', space=vmem, size = 0x9000, scoped, tag = 'internal scratch']
  #allocation2 [shape = 'f32[128,128]{1,0:T(8,128)}', space=vmem, size = 0x10000, scoped, tag = 'scratch operand']
  %s0 = inlined_call_operand.hbm [shape: s8[128,128], index: 0, kind: input, shape index: {}]
  %s1 = inlined_call_operand.hbm [shape: bf16[128,128], index: 1, kind: input, shape index: {}]
  %s2 = inlined_call_operand.hbm [shape: bf16[128,128], index: 2, kind: input, shape index: {}]
  %s3 = inlined_call_operand.hbm [shape: bf16[128,128], index: 3, kind: input, shape index: {}]
  %s4 = inlined_call_operand.hbm [shape: bf16[128,128], index: 4, kind: input, shape index: {}]
  %s5 = inlined_call_operand.vmem [shape: f32[1,128], index: 5, kind: input, shape index: {}]
  %s6 = inlined_call_operand.hbm [shape: bf16[128,128], index: 6, kind: output, shape index: {}]
  %s7 = sld [smem:[#allocation0]]
  $region62: #{tpu_custom_call.1} parent=0
    _
  %s9 = ssub.s32 1, %s7
  %s10 = scalar_select 0, %s9, %s7
  $region1: #{tpu_custom_call.1} parent=0
    #allocation3 [shape = 'u8[16384]{0}', space=vmem, size = 0x4000, scoped, tag = 'input window, operand 0, single buffered']
    #allocation4 [shape = 's32[1]{0}', space=sflag, size = 0x4, scoped, tag = 'scoped memory for tpu_custom_call.1']
    #allocation5 [shape = 's32[1]{0}', space=sflag, size = 0x4, scoped, tag = 'scoped memory for tpu_custom_call.1']
    #allocation6 [shape = 'u8[32768]{0}', space=vmem, size = 0x8000, scoped, tag = 'input window, operand 1, single buffered']
    #allocation7 [shape = 's32[1]{0}', space=sflag, size = 0x4, scoped, tag = 'scoped memory for tpu_custom_call.1']
    #allocation8 [shape = 'u8[32768]{0}', space=vmem, size = 0x8000, scoped, tag = 'input window, operand 2, single buffered']
    #allocation9 [shape = 'u8[32768]{0}', space=vmem, size = 0x8000, scoped, tag = 'input window, operand 3, single buffered']
    #allocation10 [shape = 's32[1]{0}', space=sflag, size = 0x4, scoped, tag = 'scoped memory for tpu_custom_call.1']
    #allocation11 [shape = 'u8[32768]{0}', space=vmem, size = 0x8000, scoped, tag = 'input window, operand 4, single buffered']
    #allocation12 [shape = 'u8[32768]{0}', space=vmem, size = 0x8000, scoped, tag = 'output window, operand 0, single buffered']
    %11 = vsyncpa [#allocation4], 0
    %12 = vsyncpa [#allocation7], 0
    %13 = vsyncpa [#allocation10], 0
    %14 = vsyncpa [#allocation5], 0
    // Predicated region
    $region2: #{tpu_custom_call.1} parent=1 // pred_check
      _
    $region3: #{tpu_custom_call.1} parent=1 // pred_check_branch
      %16 = sbr.rel (0) target = $region5
    $region4: #{tpu_custom_call.1} parent=1 // pred_region
      %18 = vsyncadd [#allocation4], 0
      %s19 = sshll.u32 %s0, 4
      %s20 = int_to_ptr.hbm [resolvable:$true] %s19
      %s21 = sshll.u32 [#allocation3], 4
      %s22 = int_to_ptr.vmem [resolvable:$true] %s21
      %27 = dma.hbm_to_vmem [thread:$0]  %s20, 512, %s22, [#allocation4], 128, 128, 8
    $region5: #{tpu_custom_call.1} parent=1 // pred_fallthru
      _
    // Predicated region
    $region6: #{tpu_custom_call.1} parent=1 // pred_check
      _
    $region7: #{tpu_custom_call.1} parent=1 // pred_check_branch
      %29 = sbr.rel (0) target = $region9
    $region8: #{tpu_custom_call.1} parent=1 // pred_region
      %31 = vsyncadd [#allocation7], 0
      %s32 = sshll.u32 %s1, 4
      %s33 = int_to_ptr.hbm [resolvable:$true] %s32
      %s34 = sshll.u32 [#allocation6], 4
      %s35 = int_to_ptr.vmem [resolvable:$true] %s34
      %40 = dma.hbm_to_vmem [thread:$0]  %s33, 1024, %s35, [#allocation7], 64, 64, 4
    $region9: #{tpu_custom_call.1} parent=1 // pred_fallthru
      _
    // Predicated region
    $region10: #{tpu_custom_call.1} parent=1 // pred_check
      _
    $region11: #{tpu_custom_call.1} parent=1 // pred_check_branch
      %42 = sbr.rel (0) target = $region13
    $region12: #{tpu_custom_call.1} parent=1 // pred_region
      %44 = vsyncadd [#allocation7], 0
      %s45 = sshll.u32 %s2, 4
      %s46 = int_to_ptr.hbm [resolvable:$true] %s45
      %s47 = sshll.u32 [#allocation8], 4
      %s48 = int_to_ptr.vmem [resolvable:$true] %s47
      %53 = dma.hbm_to_vmem [thread:$0]  %s46, 1024, %s48, [#allocation7], 64, 64, 4
    $region13: #{tpu_custom_call.1} parent=1 // pred_fallthru
      _
    // Predicated region
    $region14: #{tpu_custom_call.1} parent=1 // pred_check
      _
    $region15: #{tpu_custom_call.1} parent=1 // pred_check_branch
      %55 = sbr.rel (0) target = $region17
    $region16: #{tpu_custom_call.1} parent=1 // pred_region
      %57 = vsyncadd [#allocation10], 0
      %s58 = sshll.u32 %s3, 4
      %s59 = int_to_ptr.hbm [resolvable:$true] %s58
      %s60 = sshll.u32 [#allocation9], 4
      %s61 = int_to_ptr.vmem [resolvable:$true] %s60
      %66 = dma.hbm_to_vmem [thread:$0]  %s59, 1024, %s61, [#allocation10], 64, 64, 4
    $region17: #{tpu_custom_call.1} parent=1 // pred_fallthru
      _
    // Predicated region
    $region18: #{tpu_custom_call.1} parent=1 // pred_check
      _
    $region19: #{tpu_custom_call.1} parent=1 // pred_check_branch
      %68 = sbr.rel (0) target = $region21
    $region20: #{tpu_custom_call.1} parent=1 // pred_region
      %70 = vsyncadd [#allocation10], 0
      %s71 = sshll.u32 %s4, 4
      %s72 = int_to_ptr.hbm [resolvable:$true] %s71
      %s73 = sshll.u32 [#allocation11], 4
      %s74 = int_to_ptr.vmem [resolvable:$true] %s73
      %79 = dma.hbm_to_vmem [thread:$0]  %s72, 1024, %s74, [#allocation10], 64, 64, 4
    $region21: #{tpu_custom_call.1} parent=1 // pred_fallthru
      _
    // Predicated region
    $region22: #{tpu_custom_call.1} parent=1 // pred_check
      _
    $region23: #{tpu_custom_call.1} parent=1 // pred_check_branch
      %81 = sbr.rel (0) target = $region25
    $region24: #{tpu_custom_call.1} parent=1 // pred_region
      _
    $region25: #{tpu_custom_call.1} parent=1 // pred_fallthru
      _
    // Predicated region
    $region26: #{tpu_custom_call.1} parent=1 // pred_check
      _
    $region27: #{tpu_custom_call.1} parent=1 // pred_check_branch
      %83 = sbr.rel (0) target = $region29
    $region28: #{tpu_custom_call.1} parent=1 // pred_region
      %85 = dma.done [#allocation4], 512
    $region29: #{tpu_custom_call.1} parent=1 // pred_fallthru
      _
    // Predicated region
    $region30: #{tpu_custom_call.1} parent=1 // pred_check
      _
    $region31: #{tpu_custom_call.1} parent=1 // pred_check_branch
      %87 = sbr.rel (0) target = $region33
    $region32: #{tpu_custom_call.1} parent=1 // pred_region
      %89 = dma.done [#allocation7], 1024
    $region33: #{tpu_custom_call.1} parent=1 // pred_fallthru
      _
    // Predicated region
    $region34: #{tpu_custom_call.1} parent=1 // pred_check
      _
    $region35: #{tpu_custom_call.1} parent=1 // pred_check_branch
      %91 = sbr.rel (0) target = $region37
    $region36: #{tpu_custom_call.1} parent=1 // pred_region
      %93 = dma.done [#allocation7], 1024
    $region37: #{tpu_custom_call.1} parent=1 // pred_fallthru
      _
    // Predicated region
    $region38: #{tpu_custom_call.1} parent=1 // pred_check
      _
    $region39: #{tpu_custom_call.1} parent=1 // pred_check_branch
      %95 = sbr.rel (0) target = $region41
    $region40: #{tpu_custom_call.1} parent=1 // pred_region
      %97 = dma.done [#allocation10], 1024
    $region41: #{tpu_custom_call.1} parent=1 // pred_fallthru
      _
    // Predicated region
    $region42: #{tpu_custom_call.1} parent=1 // pred_check
      _
    $region43: #{tpu_custom_call.1} parent=1 // pred_check_branch
      %99 = sbr.rel (0) target = $region45
    $region44: #{tpu_custom_call.1} parent=1 // pred_region
      %101 = dma.done [#allocation10], 1024
    $region45: #{tpu_custom_call.1} parent=1 // pred_fallthru
      _
    %p102 = scmp.eq.s32.totalorder 0, 0
    // Predicated region
    $region46: #{tpu_custom_call.1} parent=1 // pred_check
      %p103 = pneg %p102
    $region47: #{tpu_custom_call.1} parent=1 // pred_check_branch
      %105 = sbr.rel (%p103) target = $region49
    $region48: #{tpu_custom_call.1} parent=1 // pred_region
      %106 = vst [vmem:[#allocation2] sm:$0xff] 0.0
      %107 = vst [vmem:[#allocation2 + $0x8] sm:$0xff] 0.0
      %108 = vst [vmem:[#allocation2 + $0x10] sm:$0xff] 0.0
      %109 = vst [vmem:[#allocation2 + $0x18] sm:$0xff] 0.0
      %110 = vst [vmem:[#allocation2 + $0x20] sm:$0xff] 0.0
      %111 = vst [vmem:[#allocation2 + $0x28] sm:$0xff] 0.0
      %112 = vst [vmem:[#allocation2 + $0x30] sm:$0xff] 0.0
      %113 = vst [vmem:[#allocation2 + $0x38] sm:$0xff] 0.0
      %114 = vst [vmem:[#allocation2 + $0x40] sm:$0xff] 0.0
      %115 = vst [vmem:[#allocation2 + $0x48] sm:$0xff] 0.0
      %116 = vst [vmem:[#allocation2 + $0x50] sm:$0xff] 0.0
      %117 = vst [vmem:[#allocation2 + $0x58] sm:$0xff] 0.0
      %118 = vst [vmem:[#allocation2 + $0x60] sm:$0xff] 0.0
      %119 = vst [vmem:[#allocation2 + $0x68] sm:$0xff] 0.0
      %120 = vst [vmem:[#allocation2 + $0x70] sm:$0xff] 0.0
      %121 = vst [vmem:[#allocation2 + $0x78] sm:$0xff] 0.0
    $region49: #{tpu_custom_call.1} parent=1 // pred_fallthru
      _
    %v122 = vld [vmem:[#allocation3] sm:$0xff]
    %v123 = vld [vmem:[#allocation3 + $0x8] sm:$0xff]
    %v124 = vld [vmem:[#allocation3 + $0x10] sm:$0xff]
    %v125 = vld [vmem:[#allocation3 + $0x18] sm:$0xff]
    %v126 = vunpack.c.0.s8 %v122
    %v127 = vunpack.c.1.s8 %v122
    %v128 = vunpack.c.2.s8 %v122
    %v129 = vunpack.c.3.s8 %v122
    %v130 = vunpack.c.0.s8 %v123
    %v131 = vunpack.c.1.s8 %v123
    %v132 = vunpack.c.2.s8 %v123
    %v133 = vunpack.c.3.s8 %v123
    %v134 = vunpack.c.0.s8 %v124
    %v135 = vunpack.c.1.s8 %v124
    %v136 = vunpack.c.2.s8 %v124
    %v137 = vunpack.c.3.s8 %v124
    %v138 = vunpack.c.0.s8 %v125
    %v139 = vunpack.c.1.s8 %v125
    %v140 = vunpack.c.2.s8 %v125
    %v141 = vunpack.c.3.s8 %v125
    %v142 = vcvt.s32.f32 %v126
    %v143 = vcvt.s32.f32 %v127
    %v144 = vcvt.s32.f32 %v128
    %v145 = vcvt.s32.f32 %v129
    %v146 = vcvt.s32.f32 %v130
    %v147 = vcvt.s32.f32 %v131
    %v148 = vcvt.s32.f32 %v132
    %v149 = vcvt.s32.f32 %v133
    %v150 = vcvt.s32.f32 %v134
    %v151 = vcvt.s32.f32 %v135
    %v152 = vcvt.s32.f32 %v136
    %v153 = vcvt.s32.f32 %v137
    %v154 = vcvt.s32.f32 %v138
    %v155 = vcvt.s32.f32 %v139
    %v156 = vcvt.s32.f32 %v140
    %v157 = vcvt.s32.f32 %v141
    %v158 = vpack.c.bf16 %v143, %v142
    %v159 = vpack.c.bf16 %v145, %v144
    %v160 = vpack.c.bf16 %v147, %v146
    %v161 = vpack.c.bf16 %v149, %v148
    %v162 = vpack.c.bf16 %v151, %v150
    %v163 = vpack.c.bf16 %v153, %v152
    %v164 = vpack.c.bf16 %v155, %v154
    %v165 = vpack.c.bf16 %v157, %v156
    %v166 = vld [vmem:[#allocation2] sm:$0xff]
    %v167 = vld [vmem:[#allocation2 + $0x8] sm:$0xff]
    %v168 = vld [vmem:[#allocation2 + $0x10] sm:$0xff]
    %v169 = vld [vmem:[#allocation2 + $0x18] sm:$0xff]
    %v170 = vld [vmem:[#allocation2 + $0x20] sm:$0xff]
    %v171 = vld [vmem:[#allocation2 + $0x28] sm:$0xff]
    %v172 = vld [vmem:[#allocation2 + $0x30] sm:$0xff]
    %v173 = vld [vmem:[#allocation2 + $0x38] sm:$0xff]
    %v174 = vld [vmem:[#allocation2 + $0x40] sm:$0xff]
    %v175 = vld [vmem:[#allocation2 + $0x48] sm:$0xff]
    %v176 = vld [vmem:[#allocation2 + $0x50] sm:$0xff]
    %v177 = vld [vmem:[#allocation2 + $0x58] sm:$0xff]
    %v178 = vld [vmem:[#allocation2 + $0x60] sm:$0xff]
    %v179 = vld [vmem:[#allocation2 + $0x68] sm:$0xff]
    %v180 = vld [vmem:[#allocation2 + $0x70] sm:$0xff]
    %v181 = vld [vmem:[#allocation2 + $0x78] sm:$0xff]
    %v182 = vld [vmem:[#allocation6] sm:$0xf]
    %v183 = vld [vmem:[#allocation6 + $0x4] sm:$0xf]
    %v184 = vld [vmem:[#allocation6 + $0x8] sm:$0xf]
    %v185 = vld [vmem:[#allocation6 + $0xc] sm:$0xf]
    %v186 = vld [vmem:[#allocation6 + $0x10] sm:$0xf]
    %v187 = vld [vmem:[#allocation6 + $0x14] sm:$0xf]
    %v188 = vld [vmem:[#allocation6 + $0x18] sm:$0xf]
    %v189 = vld [vmem:[#allocation6 + $0x1c] sm:$0xf]
    %v190 = vld [vmem:[#allocation6 + $0x20] sm:$0xf]
    %v191 = vld [vmem:[#allocation6 + $0x24] sm:$0xf]
    %v192 = vld [vmem:[#allocation6 + $0x28] sm:$0xf]
    %v193 = vld [vmem:[#allocation6 + $0x2c] sm:$0xf]
    %v194 = vld [vmem:[#allocation6 + $0x30] sm:$0xf]
    %v195 = vld [vmem:[#allocation6 + $0x34] sm:$0xf]
    %v196 = vld [vmem:[#allocation6 + $0x38] sm:$0xf]
    %v197 = vld [vmem:[#allocation6 + $0x3c] sm:$0xf]
    %v214 = vunpack.c.l.b16 %v182
    %v215 = vunpack.c.l.b16 %v183
    %v216 = vunpack.c.l.b16 %v184
    %v217 = vunpack.c.l.b16 %v185
    %v218 = vunpack.c.l.b16 %v186
    %v219 = vunpack.c.l.b16 %v187
    %v220 = vunpack.c.l.b16 %v188
    %v221 = vunpack.c.l.b16 %v189
    %v222 = vunpack.c.l.b16 %v190
    %v223 = vunpack.c.l.b16 %v191
    %v224 = vunpack.c.l.b16 %v192
    %v225 = vunpack.c.l.b16 %v193
    %v226 = vunpack.c.l.b16 %v194
    %v227 = vunpack.c.l.b16 %v195
    %v228 = vunpack.c.l.b16 %v196
    %v229 = vunpack.c.l.b16 %v197
    %v230 = vpack.c.b16 %v215, %v214
    %v231 = vpack.c.b16 %v217, %v216
    %v232 = vpack.c.b16 %v219, %v218
    %v233 = vpack.c.b16 %v221, %v220
    %v234 = vpack.c.b16 %v223, %v222
    %v235 = vpack.c.b16 %v225, %v224
    %v236 = vpack.c.b16 %v227, %v226
    %v237 = vpack.c.b16 %v229, %v228
    %246 = vmatpush.bf16.msra.mxu0 %v237
    %247 = vmatpush.bf16.msra.mxu0 %v236
    %248 = vmatpush.bf16.msra.mxu0 %v235
    %249 = vmatpush.bf16.msra.mxu0 %v234
    %250 = vmatpush.bf16.msra.mxu0 %v233
    %251 = vmatpush.bf16.msra.mxu0 %v232
    %252 = vmatpush.bf16.msra.mxu0 %v231
    %253 = vmatpush.bf16.msra.mxu0 %v230
    %254 = vmatmul.bf16.gmra.mxu0 %v158
    %v255 = vpop.f32.mrf.mxu0
    %v256 = vadd.f32 0.0, %v255
    %v257 = vpop.f32.mrf.mxu0
    %v258 = vadd.f32 0.0, %v257
    %259 = vmatmul.bf16.gmra.mxu0 %v159
    %v260 = vpop.f32.mrf.mxu0
    %v261 = vadd.f32 0.0, %v260
    %v262 = vpop.f32.mrf.mxu0
    %v263 = vadd.f32 0.0, %v262
    %264 = vmatmul.bf16.gmra.mxu0 %v160
    %v265 = vpop.f32.mrf.mxu0
    %v266 = vadd.f32 0.0, %v265
    %v267 = vpop.f32.mrf.mxu0
    %v268 = vadd.f32 0.0, %v267
    %269 = vmatmul.bf16.gmra.mxu0 %v161
    %v270 = vpop.f32.mrf.mxu0
    %v271 = vadd.f32 0.0, %v270
    %v272 = vpop.f32.mrf.mxu0
    %v273 = vadd.f32 0.0, %v272
    %274 = vmatmul.bf16.gmra.mxu0 %v162
    %v275 = vpop.f32.mrf.mxu0
    %v276 = vadd.f32 0.0, %v275
    %v277 = vpop.f32.mrf.mxu0
    %v278 = vadd.f32 0.0, %v277
    %279 = vmatmul.bf16.gmra.mxu0 %v163
    %v280 = vpop.f32.mrf.mxu0
    %v281 = vadd.f32 0.0, %v280
    %v282 = vpop.f32.mrf.mxu0
    %v283 = vadd.f32 0.0, %v282
    %284 = vmatmul.bf16.gmra.mxu0 %v164
    %v285 = vpop.f32.mrf.mxu0
    %v286 = vadd.f32 0.0, %v285
    %v287 = vpop.f32.mrf.mxu0
    %v288 = vadd.f32 0.0, %v287
    %289 = vmatmul.bf16.gmra.mxu0 %v165
    %v290 = vpop.f32.mrf.mxu0
    %v291 = vadd.f32 0.0, %v290
    %v292 = vpop.f32.mrf.mxu0
    %v293 = vadd.f32 0.0, %v292
    %294 = vdwg.mxu0
    %v295 = vadd.f32 %v166, %v256
    %v296 = vadd.f32 %v167, %v258
    %v297 = vadd.f32 %v168, %v261
    %v298 = vadd.f32 %v169, %v263
    %v299 = vadd.f32 %v170, %v266
    %v300 = vadd.f32 %v171, %v268
    %v301 = vadd.f32 %v172, %v271
    %v302 = vadd.f32 %v173, %v273
    %v303 = vadd.f32 %v174, %v276
    %v304 = vadd.f32 %v175, %v278
    %v305 = vadd.f32 %v176, %v281
    %v306 = vadd.f32 %v177, %v283
    %v307 = vadd.f32 %v178, %v286
    %v308 = vadd.f32 %v179, %v288
    %v309 = vadd.f32 %v180, %v291
    %v310 = vadd.f32 %v181, %v293
    %311 = vst [vmem:[#allocation2] sm:$0xff] %v295
    %312 = vst [vmem:[#allocation2 + $0x8] sm:$0xff] %v296
    %313 = vst [vmem:[#allocation2 + $0x10] sm:$0xff] %v297
    %314 = vst [vmem:[#allocation2 + $0x18] sm:$0xff] %v298
    %315 = vst [vmem:[#allocation2 + $0x20] sm:$0xff] %v299
    %316 = vst [vmem:[#allocation2 + $0x28] sm:$0xff] %v300
    %317 = vst [vmem:[#allocation2 + $0x30] sm:$0xff] %v301
    %318 = vst [vmem:[#allocation2 + $0x38] sm:$0xff] %v302
    %319 = vst [vmem:[#allocation2 + $0x40] sm:$0xff] %v303
    %320 = vst [vmem:[#allocation2 + $0x48] sm:$0xff] %v304
    %321 = vst [vmem:[#allocation2 + $0x50] sm:$0xff] %v305
    %322 = vst [vmem:[#allocation2 + $0x58] sm:$0xff] %v306
    %323 = vst [vmem:[#allocation2 + $0x60] sm:$0xff] %v307
    %324 = vst [vmem:[#allocation2 + $0x68] sm:$0xff] %v308
    %325 = vst [vmem:[#allocation2 + $0x70] sm:$0xff] %v309
    %326 = vst [vmem:[#allocation2 + $0x78] sm:$0xff] %v310
    // Predicated region
    $region50: #{tpu_custom_call.1} parent=1 // pred_check
      %p327 = pneg %p102
    $region51: #{tpu_custom_call.1} parent=1 // pred_check_branch
      %329 = sbr.rel (%p327) target = $region53
    $region52: #{tpu_custom_call.1} parent=1 // pred_region
      %v330 = vld [vmem:[#allocation2] sm:$0xff]
      %v331 = vld [vmem:[#allocation2 + $0x8] sm:$0xff]
      %v332 = vld [vmem:[#allocation2 + $0x10] sm:$0xff]
      %v333 = vld [vmem:[#allocation2 + $0x18] sm:$0xff]
      %v334 = vld [vmem:[#allocation2 + $0x20] sm:$0xff]
      %v335 = vld [vmem:[#allocation2 + $0x28] sm:$0xff]
      %v336 = vld [vmem:[#allocation2 + $0x30] sm:$0xff]
      %v337 = vld [vmem:[#allocation2 + $0x38] sm:$0xff]
      %v338 = vld [vmem:[#allocation2 + $0x40] sm:$0xff]
      %v339 = vld [vmem:[#allocation2 + $0x48] sm:$0xff]
      %v340 = vld [vmem:[#allocation2 + $0x50] sm:$0xff]
      %v341 = vld [vmem:[#allocation2 + $0x58] sm:$0xff]
      %v342 = vld [vmem:[#allocation2 + $0x60] sm:$0xff]
      %v343 = vld [vmem:[#allocation2 + $0x68] sm:$0xff]
      %v344 = vld [vmem:[#allocation2 + $0x70] sm:$0xff]
      %v345 = vld [vmem:[#allocation2 + $0x78] sm:$0xff]
      %v346 = vpack.c.bf16 %v331, %v330
      %v347 = vpack.c.bf16 %v333, %v332
      %v348 = vpack.c.bf16 %v335, %v334
      %v349 = vpack.c.bf16 %v337, %v336
      %v350 = vpack.c.bf16 %v339, %v338
      %v351 = vpack.c.bf16 %v341, %v340
      %v352 = vpack.c.bf16 %v343, %v342
      %v353 = vpack.c.bf16 %v345, %v344
      %v354 = vld [vmem:[#allocation9] sm:$0xf]
      %v355 = vld [vmem:[#allocation9 + $0x4] sm:$0xf]
      %v356 = vld [vmem:[#allocation9 + $0x8] sm:$0xf]
      %v357 = vld [vmem:[#allocation9 + $0xc] sm:$0xf]
      %v358 = vld [vmem:[#allocation9 + $0x10] sm:$0xf]
      %v359 = vld [vmem:[#allocation9 + $0x14] sm:$0xf]
      %v360 = vld [vmem:[#allocation9 + $0x18] sm:$0xf]
      %v361 = vld [vmem:[#allocation9 + $0x1c] sm:$0xf]
      %v362 = vld [vmem:[#allocation9 + $0x20] sm:$0xf]
      %v363 = vld [vmem:[#allocation9 + $0x24] sm:$0xf]
      %v364 = vld [vmem:[#allocation9 + $0x28] sm:$0xf]
      %v365 = vld [vmem:[#allocation9 + $0x2c] sm:$0xf]
      %v366 = vld [vmem:[#allocation9 + $0x30] sm:$0xf]
      %v367 = vld [vmem:[#allocation9 + $0x34] sm:$0xf]
      %v368 = vld [vmem:[#allocation9 + $0x38] sm:$0xf]
      %v369 = vld [vmem:[#allocation9 + $0x3c] sm:$0xf]
      %v370 = vld [vmem:[#allocation8] sm:$0xf]
      %v371 = vld [vmem:[#allocation8 + $0x4] sm:$0xf]
      %v372 = vld [vmem:[#allocation8 + $0x8] sm:$0xf]
      %v373 = vld [vmem:[#allocation8 + $0xc] sm:$0xf]
      %v374 = vld [vmem:[#allocation8 + $0x10] sm:$0xf]
      %v375 = vld [vmem:[#allocation8 + $0x14] sm:$0xf]
      %v376 = vld [vmem:[#allocation8 + $0x18] sm:$0xf]
      %v377 = vld [vmem:[#allocation8 + $0x1c] sm:$0xf]
      %v378 = vld [vmem:[#allocation8 + $0x20] sm:$0xf]
      %v379 = vld [vmem:[#allocation8 + $0x24] sm:$0xf]
      %v380 = vld [vmem:[#allocation8 + $0x28] sm:$0xf]
      %v381 = vld [vmem:[#allocation8 + $0x2c] sm:$0xf]
      %v382 = vld [vmem:[#allocation8 + $0x30] sm:$0xf]
      %v383 = vld [vmem:[#allocation8 + $0x34] sm:$0xf]
      %v384 = vld [vmem:[#allocation8 + $0x38] sm:$0xf]
      %v385 = vld [vmem:[#allocation8 + $0x3c] sm:$0xf]
      %v386 = vld [vmem:[#allocation11] sm:$0xf]
      %v387 = vld [vmem:[#allocation11 + $0x4] sm:$0xf]
      %v388 = vld [vmem:[#allocation11 + $0x8] sm:$0xf]
      %v389 = vld [vmem:[#allocation11 + $0xc] sm:$0xf]
      %v390 = vld [vmem:[#allocation11 + $0x10] sm:$0xf]
      %v391 = vld [vmem:[#allocation11 + $0x14] sm:$0xf]
      %v392 = vld [vmem:[#allocation11 + $0x18] sm:$0xf]
      %v393 = vld [vmem:[#allocation11 + $0x1c] sm:$0xf]
      %v394 = vld [vmem:[#allocation11 + $0x20] sm:$0xf]
      %v395 = vld [vmem:[#allocation11 + $0x24] sm:$0xf]
      %v396 = vld [vmem:[#allocation11 + $0x28] sm:$0xf]
      %v397 = vld [vmem:[#allocation11 + $0x2c] sm:$0xf]
      %v398 = vld [vmem:[#allocation11 + $0x30] sm:$0xf]
      %v399 = vld [vmem:[#allocation11 + $0x34] sm:$0xf]
      %v400 = vld [vmem:[#allocation11 + $0x38] sm:$0xf]
      %v401 = vld [vmem:[#allocation11 + $0x3c] sm:$0xf]
      %v418 = vunpack.c.l.b16 %v370
      %v419 = vunpack.c.l.b16 %v371
      %v420 = vunpack.c.l.b16 %v372
      %v421 = vunpack.c.l.b16 %v373
      %v422 = vunpack.c.l.b16 %v374
      %v423 = vunpack.c.l.b16 %v375
      %v424 = vunpack.c.l.b16 %v376
      %v425 = vunpack.c.l.b16 %v377
      %v426 = vunpack.c.l.b16 %v378
      %v427 = vunpack.c.l.b16 %v379
      %v428 = vunpack.c.l.b16 %v380
      %v429 = vunpack.c.l.b16 %v381
      %v430 = vunpack.c.l.b16 %v382
      %v431 = vunpack.c.l.b16 %v383
      %v432 = vunpack.c.l.b16 %v384
      %v433 = vunpack.c.l.b16 %v385
      %v434 = vpack.c.b16 %v419, %v418
      %v435 = vpack.c.b16 %v421, %v420
      %v436 = vpack.c.b16 %v423, %v422
      %v437 = vpack.c.b16 %v425, %v424
      %v438 = vpack.c.b16 %v427, %v426
      %v439 = vpack.c.b16 %v429, %v428
      %v440 = vpack.c.b16 %v431, %v430
      %v441 = vpack.c.b16 %v433, %v432
      %v466 = vunpack.c.l.b16 %v386
      %v467 = vunpack.c.l.b16 %v387
      %v468 = vunpack.c.l.b16 %v388
      %v469 = vunpack.c.l.b16 %v389
      %v470 = vunpack.c.l.b16 %v390
      %v471 = vunpack.c.l.b16 %v391
      %v472 = vunpack.c.l.b16 %v392
      %v473 = vunpack.c.l.b16 %v393
      %v474 = vunpack.c.l.b16 %v394
      %v475 = vunpack.c.l.b16 %v395
      %v476 = vunpack.c.l.b16 %v396
      %v477 = vunpack.c.l.b16 %v397
      %v478 = vunpack.c.l.b16 %v398
      %v479 = vunpack.c.l.b16 %v399
      %v480 = vunpack.c.l.b16 %v400
      %v481 = vunpack.c.l.b16 %v401
      %v482 = vpack.c.b16 %v467, %v466
      %v483 = vpack.c.b16 %v469, %v468
      %v484 = vpack.c.b16 %v471, %v470
      %v485 = vpack.c.b16 %v473, %v472
      %v486 = vpack.c.b16 %v475, %v474
      %v487 = vpack.c.b16 %v477, %v476
      %v488 = vpack.c.b16 %v479, %v478
      %v489 = vpack.c.b16 %v481, %v480
      %498 = vmatpush.bf16.msra.mxu0 %v489
      %499 = vmatpush.bf16.msra.mxu0 %v488
      %500 = vmatpush.bf16.msra.mxu0 %v487
      %501 = vmatpush.bf16.msra.mxu0 %v486
      %502 = vmatpush.bf16.msra.mxu0 %v485
      %503 = vmatpush.bf16.msra.mxu0 %v484
      %504 = vmatpush.bf16.msra.mxu0 %v483
      %505 = vmatpush.bf16.msra.mxu0 %v482
      %506 = vmatmul.bf16.gmra.mxu0 %v434
      %v507 = vpop.f32.mrf.mxu0
      %v508 = vadd.f32 0.0, %v507
      %v509 = vpop.f32.mrf.mxu0
      %v510 = vadd.f32 0.0, %v509
      %511 = vmatmul.bf16.gmra.mxu0 %v435
      %v512 = vpop.f32.mrf.mxu0
      %v513 = vadd.f32 0.0, %v512
      %v514 = vpop.f32.mrf.mxu0
      %v515 = vadd.f32 0.0, %v514
      %516 = vmatmul.bf16.gmra.mxu0 %v436
      %v517 = vpop.f32.mrf.mxu0
      %v518 = vadd.f32 0.0, %v517
      %v519 = vpop.f32.mrf.mxu0
      %v520 = vadd.f32 0.0, %v519
      %521 = vmatmul.bf16.gmra.mxu0 %v437
      %v522 = vpop.f32.mrf.mxu0
      %v523 = vadd.f32 0.0, %v522
      %v524 = vpop.f32.mrf.mxu0
      %v525 = vadd.f32 0.0, %v524
      %526 = vmatmul.bf16.gmra.mxu0 %v438
      %v527 = vpop.f32.mrf.mxu0
      %v528 = vadd.f32 0.0, %v527
      %v529 = vpop.f32.mrf.mxu0
      %v530 = vadd.f32 0.0, %v529
      %531 = vmatmul.bf16.gmra.mxu0 %v439
      %v532 = vpop.f32.mrf.mxu0
      %v533 = vadd.f32 0.0, %v532
      %v534 = vpop.f32.mrf.mxu0
      %v535 = vadd.f32 0.0, %v534
      %536 = vmatmul.bf16.gmra.mxu0 %v440
      %v537 = vpop.f32.mrf.mxu0
      %v538 = vadd.f32 0.0, %v537
      %v539 = vpop.f32.mrf.mxu0
      %v540 = vadd.f32 0.0, %v539
      %541 = vmatmul.bf16.gmra.mxu0 %v441
      %v542 = vpop.f32.mrf.mxu0
      %v543 = vadd.f32 0.0, %v542
      %v544 = vpop.f32.mrf.mxu0
      %v545 = vadd.f32 0.0, %v544
      %546 = vdwg.mxu0
      %v563 = vunpack.c.l.b16 %v354
      %v564 = vunpack.c.l.b16 %v355
      %v565 = vunpack.c.l.b16 %v356
      %v566 = vunpack.c.l.b16 %v357
      %v567 = vunpack.c.l.b16 %v358
      %v568 = vunpack.c.l.b16 %v359
      %v569 = vunpack.c.l.b16 %v360
      %v570 = vunpack.c.l.b16 %v361
      %v571 = vunpack.c.l.b16 %v362
      %v572 = vunpack.c.l.b16 %v363
      %v573 = vunpack.c.l.b16 %v364
      %v574 = vunpack.c.l.b16 %v365
      %v575 = vunpack.c.l.b16 %v366
      %v576 = vunpack.c.l.b16 %v367
      %v577 = vunpack.c.l.b16 %v368
      %v578 = vunpack.c.l.b16 %v369
      %v579 = vpack.c.b16 %v564, %v563
      %v580 = vpack.c.b16 %v566, %v565
      %v581 = vpack.c.b16 %v568, %v567
      %v582 = vpack.c.b16 %v570, %v569
      %v583 = vpack.c.b16 %v572, %v571
      %v584 = vpack.c.b16 %v574, %v573
      %v585 = vpack.c.b16 %v576, %v575
      %v586 = vpack.c.b16 %v578, %v577
      %595 = vmatpush.bf16.msra.mxu0 %v586
      %596 = vmatpush.bf16.msra.mxu0 %v585
      %597 = vmatpush.bf16.msra.mxu0 %v584
      %598 = vmatpush.bf16.msra.mxu0 %v583
      %599 = vmatpush.bf16.msra.mxu0 %v582
      %600 = vmatpush.bf16.msra.mxu0 %v581
      %601 = vmatpush.bf16.msra.mxu0 %v580
      %602 = vmatpush.bf16.msra.mxu0 %v579
      %603 = vmatmul.bf16.gmra.mxu0 %v346
      %v604 = vpop.f32.mrf.mxu0
      %v605 = vadd.f32 %v508, %v604
      %v606 = vpop.f32.mrf.mxu0
      %v607 = vadd.f32 %v510, %v606
      %608 = vmatmul.bf16.gmra.mxu0 %v347
      %v609 = vpop.f32.mrf.mxu0
      %v610 = vadd.f32 %v513, %v609
      %v611 = vpop.f32.mrf.mxu0
      %v612 = vadd.f32 %v515, %v611
      %613 = vmatmul.bf16.gmra.mxu0 %v348
      %v614 = vpop.f32.mrf.mxu0
      %v615 = vadd.f32 %v518, %v614
      %v616 = vpop.f32.mrf.mxu0
      %v617 = vadd.f32 %v520, %v616
      %618 = vmatmul.bf16.gmra.mxu0 %v349
      %v619 = vpop.f32.mrf.mxu0
      %v620 = vadd.f32 %v523, %v619
      %v621 = vpop.f32.mrf.mxu0
      %v622 = vadd.f32 %v525, %v621
      %623 = vmatmul.bf16.gmra.mxu0 %v350
      %v624 = vpop.f32.mrf.mxu0
      %v625 = vadd.f32 %v528, %v624
      %v626 = vpop.f32.mrf.mxu0
      %v627 = vadd.f32 %v530, %v626
      %628 = vmatmul.bf16.gmra.mxu0 %v351
      %v629 = vpop.f32.mrf.mxu0
      %v630 = vadd.f32 %v533, %v629
      %v631 = vpop.f32.mrf.mxu0
      %v632 = vadd.f32 %v535, %v631
      %633 = vmatmul.bf16.gmra.mxu0 %v352
      %v634 = vpop.f32.mrf.mxu0
      %v635 = vadd.f32 %v538, %v634
      %v636 = vpop.f32.mrf.mxu0
      %v637 = vadd.f32 %v540, %v636
      %638 = vmatmul.bf16.gmra.mxu0 %v353
      %v639 = vpop.f32.mrf.mxu0
      %v640 = vadd.f32 %v543, %v639
      %v641 = vpop.f32.mrf.mxu0
      %v642 = vadd.f32 %v545, %v641
      %643 = vdwg.mxu0
      %v644 = vld [vmem:[%s5] sm:$0x1]
      %v646 = vperm.slane %v644, 0
      %v648 = vadd.f32 %v605, %v646
      %v649 = vadd.f32 %v607, %v646
      %v650 = vadd.f32 %v610, %v646
      %v651 = vadd.f32 %v612, %v646
      %v652 = vadd.f32 %v615, %v646
      %v653 = vadd.f32 %v617, %v646
      %v654 = vadd.f32 %v620, %v646
      %v655 = vadd.f32 %v622, %v646
      %v656 = vadd.f32 %v625, %v646
      %v657 = vadd.f32 %v627, %v646
      %v658 = vadd.f32 %v630, %v646
      %v659 = vadd.f32 %v632, %v646
      %v660 = vadd.f32 %v635, %v646
      %v661 = vadd.f32 %v637, %v646
      %v662 = vadd.f32 %v640, %v646
      %v663 = vadd.f32 %v642, %v646
      %v664 = vmax.f32 %v648, 0.0
      %v665 = vmax.f32 %v649, 0.0
      %v666 = vmax.f32 %v650, 0.0
      %v667 = vmax.f32 %v651, 0.0
      %v668 = vmax.f32 %v652, 0.0
      %v669 = vmax.f32 %v653, 0.0
      %v670 = vmax.f32 %v654, 0.0
      %v671 = vmax.f32 %v655, 0.0
      %v672 = vmax.f32 %v656, 0.0
      %v673 = vmax.f32 %v657, 0.0
      %v674 = vmax.f32 %v658, 0.0
      %v675 = vmax.f32 %v659, 0.0
      %v676 = vmax.f32 %v660, 0.0
      %v677 = vmax.f32 %v661, 0.0
      %v678 = vmax.f32 %v662, 0.0
      %v679 = vmax.f32 %v663, 0.0
      %v680 = vpack.c.bf16 %v664, %v664
      %v681 = vpack.c.bf16 %v665, %v665
      %v682 = vpack.c.bf16 %v666, %v666
      %v683 = vpack.c.bf16 %v667, %v667
      %v684 = vpack.c.bf16 %v668, %v668
      %v685 = vpack.c.bf16 %v669, %v669
      %v686 = vpack.c.bf16 %v670, %v670
      %v687 = vpack.c.bf16 %v671, %v671
      %v688 = vpack.c.bf16 %v672, %v672
      %v689 = vpack.c.bf16 %v673, %v673
      %v690 = vpack.c.bf16 %v674, %v674
      %v691 = vpack.c.bf16 %v675, %v675
      %v692 = vpack.c.bf16 %v676, %v676
      %v693 = vpack.c.bf16 %v677, %v677
      %v694 = vpack.c.bf16 %v678, %v678
      %v695 = vpack.c.bf16 %v679, %v679
      %696 = vst [vmem:[#allocation12] sm:$0xf] %v680
      %697 = vst [vmem:[#allocation12 + $0x4] sm:$0xf] %v681
      %698 = vst [vmem:[#allocation12 + $0x8] sm:$0xf] %v682
      %699 = vst [vmem:[#allocation12 + $0xc] sm:$0xf] %v683
      %700 = vst [vmem:[#allocation12 + $0x10] sm:$0xf] %v684
      %701 = vst [vmem:[#allocation12 + $0x14] sm:$0xf] %v685
      %702 = vst [vmem:[#allocation12 + $0x18] sm:$0xf] %v686
      %703 = vst [vmem:[#allocation12 + $0x1c] sm:$0xf] %v687
      %704 = vst [vmem:[#allocation12 + $0x20] sm:$0xf] %v688
      %705 = vst [vmem:[#allocation12 + $0x24] sm:$0xf] %v689
      %706 = vst [vmem:[#allocation12 + $0x28] sm:$0xf] %v690
      %707 = vst [vmem:[#allocation12 + $0x2c] sm:$0xf] %v691
      %708 = vst [vmem:[#allocation12 + $0x30] sm:$0xf] %v692
      %709 = vst [vmem:[#allocation12 + $0x34] sm:$0xf] %v693
      %710 = vst [vmem:[#allocation12 + $0x38] sm:$0xf] %v694
      %711 = vst [vmem:[#allocation12 + $0x3c] sm:$0xf] %v695
    $region53: #{tpu_custom_call.1} parent=1 // pred_fallthru
      _
    // Predicated region
    $region54: #{tpu_custom_call.1} parent=1 // pred_check
      _
    $region55: #{tpu_custom_call.1} parent=1 // pred_check_branch
      %713 = sbr.rel (0) target = $region57
    $region56: #{tpu_custom_call.1} parent=1 // pred_region
      %715 = vsyncadd [#allocation5], 0
      %s716 = sshll.u32 [#allocation12], 4
      %s717 = int_to_ptr.vmem [resolvable:$true] %s716
      %s718 = sshll.u32 %s6, 4
      %s719 = int_to_ptr.hbm [resolvable:$true] %s718
      %724 = dma.vmem_to_hbm [thread:$0]  %s717, 1024, %s719, [#allocation5], 64, 64, 4
    $region57: #{tpu_custom_call.1} parent=1 // pred_fallthru
      _
    // Predicated region
    $region58: #{tpu_custom_call.1} parent=1 // pred_check
      _
    $region59: #{tpu_custom_call.1} parent=1 // pred_check_branch
      %726 = sbr.rel (0) target = $region61
    $region60: #{tpu_custom_call.1} parent=1 // pred_region
      %728 = dma.done [#allocation5], 1024
    $region61: #{tpu_custom_call.1} parent=1 // pred_fallthru
      _
    %729 = vsyncpa [#allocation4], 1
    %730 = vsyncpa [#allocation7], 1
    %731 = vsyncpa [#allocation10], 1
    %732 = vsyncpa [#allocation5], 1

</llo_original>
